<compile_context>
chip_gen: v7x
topology: tpu7x:2x2x1
jax: 0.10.0
libtpu: 0.0.40
codegen_flags: <defaults>
</compile_context>

<pallas_src>
import math

import jax
import jax.numpy as jnp
from jax.experimental import pallas as pl
from jax.experimental.pallas import tpu as pltpu


def _round_up(x, m):
    return ((x + m - 1) // m) * m


def _tile(dim, pref, align):
    """Pick (tile, padded_dim). Tiles are `align`-multiples (MXU width) unless
    the dim is small enough for a single full-dim tile (always legal)."""
    align = min(align, pref)
    if dim <= align:
        return dim, dim
    if dim <= pref:
        t = _round_up(dim, align)
        return t, t
    t = _round_up(pref, align)
    return t, _round_up(dim, t)


# ----------------------------------------------------------------------------
# Kernels: one (TM, TN) output tile, reducing over the K (in_features) axis.
#   x_ref    : (TM, TK)  activations
#   wt_ref   : (TK, TN)  base weight, pre-transposed to (in, out)  -> NN matmul
#   bias_ref : (1,  TN)  base bias
#   xa_ref   : (TM, r)   precomputed x @ A^T
#   bt_ref   : (r,  TN)  LoRA B^T, pre-scaled by `scaling`
# ----------------------------------------------------------------------------

def _lora_kernel_f32(x_ref, wt_ref, bias_ref, xa_ref, bt_ref, out_ref):
    """f32 output: accumulate directly into the k-resident output block."""
    k = pl.program_id(2)

    @pl.when(k == 0)
    def _init():
        out_ref[...] = jnp.broadcast_to(
            bias_ref[...].astype(jnp.float32), out_ref.shape)

    out_ref[...] += jnp.dot(x_ref[...], wt_ref[...],
                            preferred_element_type=jnp.float32)

    @pl.when(k == pl.num_programs(2) - 1)
    def _finalize():
        out_ref[...] += jnp.dot(xa_ref[...], bt_ref[...],
                                preferred_element_type=jnp.float32)


def _lora_kernel_acc(x_ref, wt_ref, bias_ref, xa_ref, bt_ref, out_ref, acc_ref):
    """Narrow (e.g. bf16) output: f32 scratch accumulator, cast once at the end."""
    k = pl.program_id(2)

    @pl.when(k == 0)
    def _init():
        acc_ref[...] = jnp.broadcast_to(
            bias_ref[...].astype(jnp.float32), acc_ref.shape)

    acc_ref[...] += jnp.dot(x_ref[...], wt_ref[...],
                            preferred_element_type=jnp.float32)

    @pl.when(k == pl.num_programs(2) - 1)
    def _finalize():
        lora = jnp.dot(xa_ref[...], bt_ref[...],
                       preferred_element_type=jnp.float32)
        out_ref[...] = (acc_ref[...] + lora).astype(out_ref.dtype)


# ----------------------------------------------------------------------------
# Load-time weight preparation (done ONCE per layer, not per forward).
# ----------------------------------------------------------------------------

def prepare_lora_params(w_base, bias, lora_a, lora_b, *, alpha, r,
                        use_rslora=False, tn=512, tk=1024):
    """w_base: (out, in). bias: (out,). lora_a: (r, in). lora_b: (out, r)."""
    out_dim, in_dim = w_base.shape
    assert lora_a.shape == (r, in_dim)
    assert lora_b.shape == (out_dim, r)
    scaling = alpha / math.sqrt(r) if use_rslora else alpha / r

    TN, Np = _tile(out_dim, tn, 256)
    TK, Kp = _tile(in_dim, tk, 256)

    w_t = jnp.swapaxes(w_base, 0, 1)                                   # (in, out)
    # Fold the scalar scaling into B in f32, cast once (avoids bf16 rounding
    # of scaling*B twice and avoids a (TM,TN) scalar multiply in the kernel).
    b_t = jnp.swapaxes(
        (lora_b.astype(jnp.float32) * scaling).astype(lora_b.dtype), 0, 1)  # (r, out)
    a_t = jnp.swapaxes(lora_a, 0, 1)                                   # (in, r) wrapper-side
    bias2d = bias.reshape(1, out_dim)

    def pad2(arr, rows, cols):
        pr, pc = rows - arr.shape[0], cols - arr.shape[1]
        return jnp.pad(arr, ((0, pr), (0, pc))) if (pr or pc) else arr

    return dict(
        w_t=pad2(w_t, Kp, Np),
        bias2d=pad2(bias2d, 1, Np),
        b_t=pad2(b_t, r, Np),
        a_t=a_t,
        in_dim=in_dim, out_dim=out_dim, r=r,
        TN=TN, TK=TK, Np=Np, Kp=Kp)


# ----------------------------------------------------------------------------
# Forward.
# ----------------------------------------------------------------------------

def lora_linear_forward(x, params, *, tm=512):
    """x: (B, S, in_features). params: output of prepare_lora_params."""
    B, S, in_dim = x.shape
    assert in_dim == params["in_dim"]
    out_dim, r = params["out_dim"], params["r"]
    TN, TK, Np, Kp = params["TN"], params["TK"], params["Np"], params["Kp"]
    M = B * S
    TM, Mp = _tile(M, tm, 256)

    x2d = x.reshape(M, in_dim)

    # LoRA A path hoisted out of the main GEMM (tiny (M, r) result).
    # TODO(synk): eval-mode (identity) dropout on the LoRA input.
    xa = jnp.dot(x2d, params["a_t"],
                 preferred_element_type=jnp.float32).astype(x.dtype)

    def pad2(arr, rows, cols):
        pr, pc = rows - arr.shape[0], cols - arr.shape[1]
        return jnp.pad(arr, ((0, pr), (0, pc))) if (pr or pc) else arr

    x_p = pad2(x2d, Mp, Kp)       # no-op when M/K already tile-aligned
    xa_p = pad2(xa, Mp, r)

    grid = (Mp // TM, Np // TN, Kp // TK)
    gm, gn, gk = grid

    out_dtype = x.dtype
    f32_out = out_dtype == jnp.float32
    kernel = _lora_kernel_f32 if f32_out else _lora_kernel_acc
    scratch = [] if f32_out else [pltpu.VMEM((TM, TN), jnp.float32)]

    itemsize = jnp.dtype(x.dtype).itemsize
    out_item = jnp.dtype(out_dtype).itemsize

    # Double-buffered input tiles + double-buffered output + optional f32 scratch.
    in_tile_bytes = (TM * TK + TK * TN + TN + TM * r + r * TN) * itemsize
    vmem_need = (2 * in_tile_bytes + 2 * TM * TN * out_item
                 + (0 if f32_out else TM * TN * 4))
    # 48 MiB cap: safe headroom on v7x's 64 MiB physical VMEM, plenty everywhere.
    vmem_limit = int(min(max(2 * vmem_need, 32 * 1024 * 1024), 48 * 1024 * 1024))

    cost = pl.CostEstimate(
        flops=2 * M * in_dim * out_dim + 2 * M * r * out_dim,
        transcendentals=0,
        bytes_accessed=(Mp * Kp * itemsize * gn          # x re-streamed per N tile
                        + Kp * Np * itemsize * gm        # W re-streamed per M tile
                        + Np * itemsize * gm * gk        # bias
                        + Mp * r * itemsize * gn * gk    # xa
                        + r * Np * itemsize * gm * gk    # pre-scaled B
                        + Mp * Np * out_item))           # output written once

    out_p = pl.pallas_call(
        kernel,
        out_shape=jax.ShapeDtypeStruct((Mp, Np), out_dtype),
        grid_spec=pltpu.PrefetchScalarGridSpec(
            num_scalar_prefetch=0,
            grid=grid,
            in_specs=[
                pl.BlockSpec((TM, TK), lambda i, j, k: (i, k)),   # x
                pl.BlockSpec((TK, TN), lambda i, j, k: (k, j)),   # W^T (in, out)
                pl.BlockSpec((1, TN), lambda i, j, k: (0, j)),    # bias
                pl.BlockSpec((TM, r), lambda i, j, k: (i, 0)),    # xa = x @ A^T
                pl.BlockSpec((r, TN), lambda i, j, k: (0, j)),    # scaled B^T
            ],
            out_specs=pl.BlockSpec((TM, TN), lambda i, j, k: (i, j)),
            scratch_shapes=scratch),
        compiler_params=pltpu.CompilerParams(
            dimension_semantics=("parallel", "parallel", "arbitrary"),
            vmem_limit_bytes=vmem_limit),
        cost_estimate=cost,
    )(x_p, params["w_t"], params["bias2d"], xa_p, params["b_t"])

    return out_p[:M, :out_dim].reshape(B, S, out_dim)


# ----------------------------------------------------------------------------
# Pure-JAX reference + tests.
# ----------------------------------------------------------------------------

def _reference(x, w_base, bias, lora_a, lora_b, alpha, r, use_rslora=False):
    scaling = alpha / math.sqrt(r) if use_rslora else alpha / r
    B, S, in_dim = x.shape
    x2d = x.reshape(-1, in_dim).astype(jnp.float32)
    ref = x2d @ w_base.T.astype(jnp.float32) + bias.astype(jnp.float32)
    ref = ref + scaling * ((x2d @ lora_a.T.astype(jnp.float32))
                           @ lora_b.T.astype(jnp.float32))
    return ref.reshape(B, S, w_base.shape[0])


def _make_case(key, batch, seq, in_features, out_features, r, dtype):
    kx, kw, kb, ka, kbw = jax.random.split(key, 5)
    w_base = (jax.random.normal(kw, (out_features, in_features)) * 0.05).astype(dtype)
    bias = (jax.random.normal(kb, (out_features,)) * 0.01).astype(dtype)
    gain = math.sqrt(2.0 / (1.0 + 5.0))
    bound = math.sqrt(3.0) * gain / math.sqrt(in_features)
    lora_a = jax.random.uniform(ka, (r, in_features), jnp.float32,
                                -bound, bound).astype(dtype)
    lora_b = (jax.random.normal(kbw, (out_features, r)) * 0.02).astype(dtype)
    x = jax.random.normal(kx, (batch, seq, in_features)).astype(dtype)
    return x, w_base, bias, lora_a, lora_b


if __name__ == "__main__":
    key = jax.random.PRNGKey(0)
    k1, k2, k3 = jax.random.split(key, 3)

    # Case 1: small shapes consistent with the module (single-tile, f32 path).
    r1, alpha1 = 8, 16
    x, w_base, bias, lora_a, lora_b = _make_case(k1, 2, 8, 32, 32, r1, jnp.float32)
    params = prepare_lora_params(w_base, bias, lora_a, lora_b, alpha=alpha1, r=r1)
    out = jax.block_until_ready(lora_linear_forward(x, params))
    ref = _reference(x, w_base, bias, lora_a, lora_b, alpha1, r1)
    assert jnp.allclose(out.astype(jnp.float32), ref, atol=1e-5, rtol=1e-5), \
        "mismatch vs reference (case 1)"

    # Case 2: multi-tile grid, K reduction and N/M padding paths (f32).
    r2, alpha2 = 8, 16
    x, w_base, bias, lora_a, lora_b = _make_case(k2, 2, 40, 384, 320, r2, jnp.float32)
    params = prepare_lora_params(w_base, bias, lora_a, lora_b, alpha=alpha2, r=r2,
                                 tn=128, tk=128)
    out = jax.block_until_ready(lora_linear_forward(x, params, tm=32))
    ref = _reference(x, w_base, bias, lora_a, lora_b, alpha2, r2)
    assert jnp.allclose(out.astype(jnp.float32), ref, atol=1e-4, rtol=1e-4), \
        "mismatch vs reference (case 2)"

    # Case 3: bf16 inputs/weights (production-style), exercises the f32-scratch path.
    r3, alpha3 = 8, 16
    x, w_base, bias, lora_a, lora_b = _make_case(k3, 2, 64, 256, 256, r3, jnp.bfloat16)
    params = prepare_lora_params(w_base, bias, lora_a, lora_b, alpha=alpha3, r=r3)
    out = jax.block_until_ready(lora_linear_forward(x, params))
    ref = _reference(x, w_base, bias, lora_a, lora_b, alpha3, r3)
    assert jnp.allclose(out.astype(jnp.float32), ref, atol=5e-2, rtol=5e-2), \
        "mismatch vs reference (case 3, bf16)"

    print("KERNEL_OK")
</pallas_src>

<mosaic_0001>
module attributes {stable_mosaic.version = 11 : i64} {
  func.func @_lora_kernel_f32(%arg0: i32, %arg1: i32, %arg2: i32, %arg3: memref<16x32xf32, #tpu.memory_space<vmem>>, %arg4: memref<32x32xf32, #tpu.memory_space<vmem>>, %arg5: memref<1x32xf32, #tpu.memory_space<vmem>>, %arg6: memref<16x8xf32, #tpu.memory_space<vmem>>, %arg7: memref<8x32xf32, #tpu.memory_space<vmem>>, %arg8: memref<16x32xf32, #tpu.memory_space<vmem>>) attributes {dimension_semantics = [#tpu.dimension_semantics<parallel>, #tpu.dimension_semantics<parallel>, #tpu.dimension_semantics<arbitrary>], iteration_bounds = array<i64: 1, 1, 1>, scalar_prefetch = 0 : i64, scratch_operands = 0 : i64, tpu.core_type = #tpu.core_type<tc>, window_params = [{transform_indices = @transform_0, window_bounds = array<i64: 16, 32>}, {transform_indices = @transform_1, window_bounds = array<i64: 32, 32>}, {transform_indices = @transform_2, window_bounds = array<i64: 1, 32>}, {transform_indices = @transform_3, window_bounds = array<i64: 16, 8>}, {transform_indices = @transform_4, window_bounds = array<i64: 8, 32>}, {transform_indices = @transform_5, window_bounds = array<i64: 16, 32>}]} {
    %c0_i32 = arith.constant 0 : i32
    %0 = arith.cmpi eq, %arg2, %c0_i32 : i32
    %1 = arith.extui %0 : i1 to i32
    %c0_i32_0 = arith.constant 0 : i32
    %2 = arith.cmpi ne, %1, %c0_i32_0 : i32
    scf.if %2 {
      %c0_10 = arith.constant 0 : index
      %c0_11 = arith.constant 0 : index
      %12 = vector.load %arg5[%c0_10, %c0_11] : memref<1x32xf32, #tpu.memory_space<vmem>>, vector<1x32xf32>
      %13 = vector.shape_cast %12 : vector<1x32xf32> to vector<1x32xf32>
      %14 = vector.broadcast %13 : vector<1x32xf32> to vector<16x32xf32>
      %c0_12 = arith.constant 0 : index
      %c0_13 = arith.constant 0 : index
      %15 = vector.load %arg8[%c0_12, %c0_13] : memref<16x32xf32, #tpu.memory_space<vmem>>, vector<16x32xf32>
      tpu.vector_store %arg8[%c0_12, %c0_13], %14 {strides = array<i32>} : memref<16x32xf32, #tpu.memory_space<vmem>>, vector<16x32xf32>,
    } else {
    }
    %c0 = arith.constant 0 : index
    %c0_1 = arith.constant 0 : index
    %3 = vector.load %arg8[%c0, %c0_1] : memref<16x32xf32, #tpu.memory_space<vmem>>, vector<16x32xf32>
    %c0_2 = arith.constant 0 : index
    %c0_3 = arith.constant 0 : index
    %4 = vector.load %arg3[%c0_2, %c0_3] : memref<16x32xf32, #tpu.memory_space<vmem>>, vector<16x32xf32>
    %c0_4 = arith.constant 0 : index
    %c0_5 = arith.constant 0 : index
    %5 = vector.load %arg4[%c0_4, %c0_5] : memref<32x32xf32, #tpu.memory_space<vmem>>, vector<32x32xf32>
    %cst = arith.constant dense<0.000000e+00> : vector<16x32xf32>
    %6 = tpu.matmul %4, %5, %cst {dimension_numbers = #tpu.dot_dimension_numbers<[1], [0], [0], [1], [0, 0, 1, 1], [], []>} : vector<16x32xf32>, vector<32x32xf32>, vector<16x32xf32> -> vector<16x32xf32>
    %7 = arith.addf %3, %6 : vector<16x32xf32>
    %c0_6 = arith.constant 0 : index
    %c0_7 = arith.constant 0 : index
    %8 = vector.load %arg8[%c0_6, %c0_7] : memref<16x32xf32, #tpu.memory_space<vmem>>, vector<16x32xf32>
    tpu.vector_store %arg8[%c0_6, %c0_7], %7 {strides = array<i32>} : memref<16x32xf32, #tpu.memory_space<vmem>>, vector<16x32xf32>,
    %c0_i32_8 = arith.constant 0 : i32
    %9 = arith.cmpi eq, %arg2, %c0_i32_8 : i32
    %10 = arith.extui %9 : i1 to i32
    %c0_i32_9 = arith.constant 0 : i32
    %11 = arith.cmpi ne, %10, %c0_i32_9 : i32
    scf.if %11 {
      %c0_10 = arith.constant 0 : index
      %c0_11 = arith.constant 0 : index
      %12 = vector.load %arg8[%c0_10, %c0_11] : memref<16x32xf32, #tpu.memory_space<vmem>>, vector<16x32xf32>
      %c0_12 = arith.constant 0 : index
      %c0_13 = arith.constant 0 : index
      %13 = vector.load %arg6[%c0_12, %c0_13] : memref<16x8xf32, #tpu.memory_space<vmem>>, vector<16x8xf32>
      %c0_14 = arith.constant 0 : index
      %c0_15 = arith.constant 0 : index
      %14 = vector.load %arg7[%c0_14, %c0_15] : memref<8x32xf32, #tpu.memory_space<vmem>>, vector<8x32xf32>
      %cst_16 = arith.constant dense<0.000000e+00> : vector<16x32xf32>
      %15 = tpu.matmul %13, %14, %cst_16 {dimension_numbers = #tpu.dot_dimension_numbers<[1], [0], [0], [1], [0, 0, 1, 1], [], []>} : vector<16x8xf32>, vector<8x32xf32>, vector<16x32xf32> -> vector<16x32xf32>
      %16 = arith.addf %12, %15 : vector<16x32xf32>
      %c0_17 = arith.constant 0 : index
      %c0_18 = arith.constant 0 : index
      %17 = vector.load %arg8[%c0_17, %c0_18] : memref<16x32xf32, #tpu.memory_space<vmem>>, vector<16x32xf32>
      tpu.vector_store %arg8[%c0_17, %c0_18], %16 {strides = array<i32>} : memref<16x32xf32, #tpu.memory_space<vmem>>, vector<16x32xf32>,
    } else {
    }
    return
  }
  func.func @transform_0(%arg0: i32, %arg1: i32, %arg2: i32) -> (i32, i32) {
    %c0_i32 = arith.constant 0 : i32
    return %arg0, %arg2 : i32, i32
  }
  func.func @transform_1(%arg0: i32, %arg1: i32, %arg2: i32) -> (i32, i32) {
    %c0_i32 = arith.constant 0 : i32
    return %arg2, %arg1 : i32, i32
  }
  func.func @transform_2(%arg0: i32, %arg1: i32, %arg2: i32) -> (i32, i32) {
    %c0_i32 = arith.constant 0 : i32
    %c0_i32_0 = arith.constant 0 : i32
    return %c0_i32, %arg1 : i32, i32
  }
  func.func @transform_3(%arg0: i32, %arg1: i32, %arg2: i32) -> (i32, i32) {
    %c0_i32 = arith.constant 0 : i32
    %c0_i32_0 = arith.constant 0 : i32
    return %arg0, %c0_i32 : i32, i32
  }
  func.func @transform_4(%arg0: i32, %arg1: i32, %arg2: i32) -> (i32, i32) {
    %c0_i32 = arith.constant 0 : i32
    %c0_i32_0 = arith.constant 0 : i32
    return %c0_i32, %arg1 : i32, i32
  }
  func.func @transform_5(%arg0: i32, %arg1: i32, %arg2: i32) -> (i32, i32) {
    %c0_i32 = arith.constant 0 : i32
    return %arg0, %arg1 : i32, i32
  }
}

</mosaic_0001>

<llo_original>
// kernel: tpu_custom_call.1
$region0: #{tpu_custom_call.1}
  #allocation0 [shape = 'u32[]', space=smem, size = 0x4, offset = 0x4, fixed_abs, tag = 'smem constant byte address 0x4 - core index']
  #allocation1 [shape = 'u32[144,128]{1,0:T(1,128)}', space=vmem, size = 0x12000, scoped, tag = 'internal scratch']
  %s0 = inlined_call_operand.vmem [shape: f32[16,32], index: 0, kind: input, shape index: {}]
  %s1 = inlined_call_operand.hbm [shape: f32[32,32], index: 1, kind: input, shape index: {}]
  %s2 = inlined_call_operand.vmem [shape: f32[1,32], index: 2, kind: input, shape index: {}]
  %s3 = inlined_call_operand.vmem [shape: f32[16,8], index: 3, kind: input, shape index: {}]
  %s4 = inlined_call_operand.vmem [shape: f32[8,32], index: 4, kind: input, shape index: {}]
  %s5 = inlined_call_operand.hbm [shape: f32[16,32], index: 5, kind: output, shape index: {}]
  %s6 = sld [smem:[#allocation0]]
  $region42: #{tpu_custom_call.1} parent=0
    _
  %s8 = ssub.s32 1, %s6
  %s9 = scalar_select 0, %s8, %s6
  $region1: #{tpu_custom_call.1} parent=0
    #allocation2 [shape = 'u8[16384]{0}', space=vmem, size = 0x4000, scoped, tag = 'input window, operand 1, single buffered']
    #allocation3 [shape = 's32[1]{0}', space=sflag, size = 0x4, scoped, tag = 'scoped memory for tpu_custom_call.1']
    #allocation4 [shape = 's32[1]{0}', space=sflag, size = 0x4, scoped, tag = 'scoped memory for tpu_custom_call.1']
    #allocation5 [shape = 'u8[8192]{0}', space=vmem, size = 0x2000, scoped, tag = 'output window, operand 0, single buffered']
    %10 = vsyncpa [#allocation3], 0
    %11 = vsyncpa [#allocation4], 0
    // Predicated region
    $region2: #{tpu_custom_call.1} parent=1 // pred_check
      _
    $region3: #{tpu_custom_call.1} parent=1 // pred_check_branch
      %13 = sbr.rel (0) target = $region5
    $region4: #{tpu_custom_call.1} parent=1 // pred_region
      _
    $region5: #{tpu_custom_call.1} parent=1 // pred_fallthru
      _
    // Predicated region
    $region6: #{tpu_custom_call.1} parent=1 // pred_check
      _
    $region7: #{tpu_custom_call.1} parent=1 // pred_check_branch
      %15 = sbr.rel (0) target = $region9
    $region8: #{tpu_custom_call.1} parent=1 // pred_region
      %s17 = ssub.s32 512, 512
      %18 = vsyncadd [#allocation3], %s17
      %s19 = sshll.u32 [#allocation2], 4
      %s20 = int_to_ptr.vmem [resolvable:$true] %s19
      %25 = dma.hbm_to_vmem [thread:$0]  %s1, 512, %s20, [#allocation3], 128, 128, 8
    $region9: #{tpu_custom_call.1} parent=1 // pred_fallthru
      _
    // Predicated region
    $region10: #{tpu_custom_call.1} parent=1 // pred_check
      _
    $region11: #{tpu_custom_call.1} parent=1 // pred_check_branch
      %27 = sbr.rel (0) target = $region13
    $region12: #{tpu_custom_call.1} parent=1 // pred_region
      _
    $region13: #{tpu_custom_call.1} parent=1 // pred_fallthru
      _
    // Predicated region
    $region14: #{tpu_custom_call.1} parent=1 // pred_check
      _
    $region15: #{tpu_custom_call.1} parent=1 // pred_check_branch
      %29 = sbr.rel (0) target = $region17
    $region16: #{tpu_custom_call.1} parent=1 // pred_region
      _
    $region17: #{tpu_custom_call.1} parent=1 // pred_fallthru
      _
    // Predicated region
    $region18: #{tpu_custom_call.1} parent=1 // pred_check
      _
    $region19: #{tpu_custom_call.1} parent=1 // pred_check_branch
      %31 = sbr.rel (0) target = $region21
    $region20: #{tpu_custom_call.1} parent=1 // pred_region
      _
    $region21: #{tpu_custom_call.1} parent=1 // pred_fallthru
      _
    // Predicated region
    $region22: #{tpu_custom_call.1} parent=1 // pred_check
      _
    $region23: #{tpu_custom_call.1} parent=1 // pred_check_branch
      %33 = sbr.rel (0) target = $region25
    $region24: #{tpu_custom_call.1} parent=1 // pred_region
      %34 = dma.done [#allocation3], 512
    $region25: #{tpu_custom_call.1} parent=1 // pred_fallthru
      _
    %p35 = scmp.eq.s32.totalorder 0, 0
    // Predicated region
    $region26: #{tpu_custom_call.1} parent=1 // pred_check
      %p36 = pneg %p35
    $region27: #{tpu_custom_call.1} parent=1 // pred_check_branch
      %38 = sbr.rel (%p36) target = $region29
    $region28: #{tpu_custom_call.1} parent=1 // pred_region
      %v39 = vld [vmem:[%s2] sm:$0x1]
      %v41 = vlaneseq
      %v42 = vshrl.u32 %v41, 7
      %v43 = vsub.s32 0, %v42
      %v44 = vrot.slane %v39, %v43
      %vm46 = vcmask 261120
      %47 = vst.msk [vmem:[#allocation5] sm:$0xff] %vm46, %v44
      %48 = vst.msk [vmem:[#allocation5 + $0x8] sm:$0xff] %vm46, %v44
    $region29: #{tpu_custom_call.1} parent=1 // pred_fallthru
      _
    %v49 = vld [vmem:[#allocation5] sm:$0xff]
    %v50 = vld [vmem:[#allocation5 + $0x8] sm:$0xff]
    %v51 = vld [vmem:[%s0] sm:$0xff]
    %v52 = vld [vmem:[%s0 + $0x8] sm:$0xff]
    %v53 = vld [vmem:[#allocation2] sm:$0xff]
    %v54 = vld [vmem:[#allocation2 + $0x8] sm:$0xff]
    %v55 = vld [vmem:[#allocation2 + $0x10] sm:$0xff]
    %v56 = vld [vmem:[#allocation2 + $0x18] sm:$0xff]
    %vm57 = vcmask 261120
    %v59 = vsel %vm57, %v51, 0
    %v62 = vsel %vm57, %v52, 0
    %64 = vmatprep.subr.mxu0 0.0
    %65 = vmatpush1.msra.mxu0 %v53
    %66 = vmatprep.subr.mxu0 0.0
    %67 = vmatpush1.msra.mxu0 %v54
    %68 = vmatprep.subr.mxu0 0.0
    %69 = vmatpush1.msra.mxu0 %v55
    %70 = vmatprep.subr.mxu0 0.0
    %71 = vmatpush1.msra.mxu0 %v56
    %72 = vmatprep.subr.mxu0 0.0
    %73 = vmatpush1.msra.mxu0 0.0
    %74 = vmatprep.subr.mxu0 0.0
    %75 = vmatpush1.msra.mxu0 0.0
    %76 = vmatprep.subr.mxu0 0.0
    %77 = vmatpush1.msra.mxu0 0.0
    %78 = vmatprep.subr.mxu0 0.0
    %79 = vmatpush1.msra.mxu0 0.0
    %80 = vmatprep.subr.mxu0 0.0
    %81 = vmatpush1.msra.mxu0 0.0
    %82 = vmatprep.subr.mxu0 0.0
    %83 = vmatpush1.msra.mxu0 0.0
    %84 = vmatprep.subr.mxu0 0.0
    %85 = vmatpush1.msra.mxu0 0.0
    %86 = vmatprep.subr.mxu0 0.0
    %87 = vmatpush1.msra.mxu0 0.0
    %88 = vmatprep.subr.mxu0 0.0
    %89 = vmatpush1.msra.mxu0 0.0
    %90 = vmatprep.subr.mxu0 0.0
    %91 = vmatpush1.msra.mxu0 0.0
    %92 = vmatprep.subr.mxu0 0.0
    %93 = vmatpush1.msra.mxu0 0.0
    %94 = vmatprep.subr.mxu0 0.0
    %95 = vmatpush1.msra.mxu0 0.0
    %96 = vmatprep.subr.mxu0 0.0
    %97 = vmatpush1.msra.mxu0 0.0
    %98 = vmatprep.subr.mxu0 0.0
    %99 = vmatpush1.msra.mxu0 0.0
    %100 = vmatprep.subr.mxu0 0.0
    %101 = vmatpush1.msra.mxu0 0.0
    %102 = vmatprep.subr.mxu0 0.0
    %103 = vmatpush1.msra.mxu0 0.0
    %104 = vmatprep.subr.mxu0 0.0
    %105 = vmatpush1.msra.mxu0 0.0
    %106 = vmatprep.subr.mxu0 0.0
    %107 = vmatpush1.msra.mxu0 0.0
    %108 = vmatprep.subr.mxu0 0.0
    %109 = vmatpush1.msra.mxu0 0.0
    %110 = vmatprep.subr.mxu0 0.0
    %111 = vmatpush1.msra.mxu0 0.0
    %112 = vmatprep.subr.mxu0 0.0
    %113 = vmatpush1.msra.mxu0 0.0
    %114 = vmatprep.subr.mxu0 0.0
    %115 = vmatpush1.msra.mxu0 0.0
    %116 = vmatprep.subr.mxu0 0.0
    %117 = vmatpush1.msra.mxu0 0.0
    %118 = vmatprep.subr.mxu0 0.0
    %119 = vmatpush1.msra.mxu0 0.0
    %120 = vmatprep.subr.mxu0 0.0
    %121 = vmatpush1.msra.mxu0 0.0
    %122 = vmatprep.subr.mxu0 0.0
    %123 = vmatpush1.msra.mxu0 0.0
    %124 = vmatprep.subr.mxu0 0.0
    %125 = vmatpush1.msra.mxu0 0.0
    %126 = vmatprep.subr.mxu0 0.0
    %127 = vmatpush1.msra.mxu0 0.0
    %128 = vmatprep.mubr.f32.mxu0 0.0
    %129 = vmatmul.mubr.f32.gmra.mrb[0].mxu0 %v59
    %v130 = vpop.f32.mrb[0].mxu0
    %v131 = vadd.f32 0.0, %v130
    %v132 = vpop.f32.mrb[0].mxu0
    %133 = vmatprep.mubr.f32.mxu0 0.0
    %134 = vmatmul.mubr.f32.gmra.mrb[0].mxu0 %v62
    %v135 = vpop.f32.mrb[0].mxu0
    %v136 = vadd.f32 0.0, %v135
    %v137 = vpop.f32.mrb[0].mxu0
    %138 = vdwg.mxu0
    %v139 = vadd.f32 %v49, %v131
    %v140 = vadd.f32 %v50, %v136
    %141 = vst.msk [vmem:[#allocation5] sm:$0xff] %vm57, %v139
    %142 = vst.msk [vmem:[#allocation5 + $0x8] sm:$0xff] %vm57, %v140
    // Predicated region
    $region30: #{tpu_custom_call.1} parent=1 // pred_check
      %p143 = pneg %p35
    $region31: #{tpu_custom_call.1} parent=1 // pred_check_branch
      %145 = sbr.rel (%p143) target = $region33
    $region32: #{tpu_custom_call.1} parent=1 // pred_region
      %v146 = vld [vmem:[#allocation5] sm:$0xff]
      %v147 = vld [vmem:[#allocation5 + $0x8] sm:$0xff]
      %v148 = vld [vmem:[%s3] sm:$0xff]
      %v149 = vld [vmem:[%s3 + $0x8] sm:$0xff]
      %v150 = vld [vmem:[%s4] sm:$0xff]
      %vm151 = vcmask 64512
      %v153 = vsel %vm151, %v148, 0
      %v156 = vsel %vm151, %v149, 0
      %158 = vmatprep.subr.mxu0 0.0
      %159 = vmatpush1.msra.mxu0 %v150
      %160 = vmatprep.subr.mxu0 0.0
      %161 = vmatpush1.msra.mxu0 0.0
      %162 = vmatprep.subr.mxu0 0.0
      %163 = vmatpush1.msra.mxu0 0.0
      %164 = vmatprep.subr.mxu0 0.0
      %165 = vmatpush1.msra.mxu0 0.0
      %166 = vmatprep.subr.mxu0 0.0
      %167 = vmatpush1.msra.mxu0 0.0
      %168 = vmatprep.subr.mxu0 0.0
      %169 = vmatpush1.msra.mxu0 0.0
      %170 = vmatprep.subr.mxu0 0.0
      %171 = vmatpush1.msra.mxu0 0.0
      %172 = vmatprep.subr.mxu0 0.0
      %173 = vmatpush1.msra.mxu0 0.0
      %174 = vmatprep.subr.mxu0 0.0
      %175 = vmatpush1.msra.mxu0 0.0
      %176 = vmatprep.subr.mxu0 0.0
      %177 = vmatpush1.msra.mxu0 0.0
      %178 = vmatprep.subr.mxu0 0.0
      %179 = vmatpush1.msra.mxu0 0.0
      %180 = vmatprep.subr.mxu0 0.0
      %181 = vmatpush1.msra.mxu0 0.0
      %182 = vmatprep.subr.mxu0 0.0
      %183 = vmatpush1.msra.mxu0 0.0
      %184 = vmatprep.subr.mxu0 0.0
      %185 = vmatpush1.msra.mxu0 0.0
      %186 = vmatprep.subr.mxu0 0.0
      %187 = vmatpush1.msra.mxu0 0.0
      %188 = vmatprep.subr.mxu0 0.0
      %189 = vmatpush1.msra.mxu0 0.0
      %190 = vmatprep.subr.mxu0 0.0
      %191 = vmatpush1.msra.mxu0 0.0
      %192 = vmatprep.subr.mxu0 0.0
      %193 = vmatpush1.msra.mxu0 0.0
      %194 = vmatprep.subr.mxu0 0.0
      %195 = vmatpush1.msra.mxu0 0.0
      %196 = vmatprep.subr.mxu0 0.0
      %197 = vmatpush1.msra.mxu0 0.0
      %198 = vmatprep.subr.mxu0 0.0
      %199 = vmatpush1.msra.mxu0 0.0
      %200 = vmatprep.subr.mxu0 0.0
      %201 = vmatpush1.msra.mxu0 0.0
      %202 = vmatprep.subr.mxu0 0.0
      %203 = vmatpush1.msra.mxu0 0.0
      %204 = vmatprep.subr.mxu0 0.0
      %205 = vmatpush1.msra.mxu0 0.0
      %206 = vmatprep.subr.mxu0 0.0
      %207 = vmatpush1.msra.mxu0 0.0
      %208 = vmatprep.subr.mxu0 0.0
      %209 = vmatpush1.msra.mxu0 0.0
      %210 = vmatprep.subr.mxu0 0.0
      %211 = vmatpush1.msra.mxu0 0.0
      %212 = vmatprep.subr.mxu0 0.0
      %213 = vmatpush1.msra.mxu0 0.0
      %214 = vmatprep.subr.mxu0 0.0
      %215 = vmatpush1.msra.mxu0 0.0
      %216 = vmatprep.subr.mxu0 0.0
      %217 = vmatpush1.msra.mxu0 0.0
      %218 = vmatprep.subr.mxu0 0.0
      %219 = vmatpush1.msra.mxu0 0.0
      %220 = vmatprep.subr.mxu0 0.0
      %221 = vmatpush1.msra.mxu0 0.0
      %222 = vmatprep.mubr.f32.mxu0 0.0
      %223 = vmatmul.mubr.f32.gmra.mrb[0].mxu0 %v153
      %v224 = vpop.f32.mrb[0].mxu0
      %v225 = vadd.f32 0.0, %v224
      %v226 = vpop.f32.mrb[0].mxu0
      %227 = vmatprep.mubr.f32.mxu0 0.0
      %228 = vmatmul.mubr.f32.gmra.mrb[0].mxu0 %v156
      %v229 = vpop.f32.mrb[0].mxu0
      %v230 = vadd.f32 0.0, %v229
      %v231 = vpop.f32.mrb[0].mxu0
      %232 = vdwg.mxu0
      %v233 = vadd.f32 %v146, %v225
      %v234 = vadd.f32 %v147, %v230
      %235 = vst.msk [vmem:[#allocation5] sm:$0xff] %vm57, %v233
      %236 = vst.msk [vmem:[#allocation5 + $0x8] sm:$0xff] %vm57, %v234
    $region33: #{tpu_custom_call.1} parent=1 // pred_fallthru
      _
    // Predicated region
    $region34: #{tpu_custom_call.1} parent=1 // pred_check
      _
    $region35: #{tpu_custom_call.1} parent=1 // pred_check_branch
      %238 = sbr.rel (0) target = $region37
    $region36: #{tpu_custom_call.1} parent=1 // pred_region
      %s240 = ssub.s32 256, 256
      %241 = vsyncadd [#allocation4], %s240
      %s242 = sshll.u32 [#allocation5], 4
      %s243 = int_to_ptr.vmem [resolvable:$true] %s242
      %248 = dma.vmem_to_hbm [thread:$0]  %s243, 256, %s5, [#allocation4], 128, 128, 8
    $region37: #{tpu_custom_call.1} parent=1 // pred_fallthru
      _
    // Predicated region
    $region38: #{tpu_custom_call.1} parent=1 // pred_check
      _
    $region39: #{tpu_custom_call.1} parent=1 // pred_check_branch
      %250 = sbr.rel (0) target = $region41
    $region40: #{tpu_custom_call.1} parent=1 // pred_region
      %251 = dma.done [#allocation4], 256
    $region41: #{tpu_custom_call.1} parent=1 // pred_fallthru
      _
    %252 = vsyncpa [#allocation3], 1
    %253 = vsyncpa [#allocation4], 1

</llo_original>
